<compile_context>
chip_gen: v5e
topology: v5e:2x2
jax: 0.10.0
libtpu: 0.0.40
codegen_flags: <defaults>
</compile_context>

<pallas_src>
import functools

import jax
import jax.numpy as jnp
from jax.experimental import pallas as pl
from jax.experimental.pallas import tpu as pltpu


def _round_up(x, m):
    return (x + m - 1) // m * m


def _critic_kernel(xt_ref, w1t_ref, b1_ref, w2_ref, b2_ref, q_ref):
    """One batch tile (batch on lanes).

    xt_ref : [D, tile_b]   input tile (native dtype)
    w1t_ref: [H, D]        fc1 weight, transposed
    b1_ref : [H, 1]        fc1 bias (column)
    w2_ref : [H, 1]        fc2 weight (column)
    b2_ref : [1]           fc2 bias, SMEM scalar
    q_ref  : [1, tile_b]   output row (lane-dense)
    """
    # fc1 on the MXU: [H, D] @ [D, tile_b] -> [H, tile_b], f32 accumulation.
    # (default MXU precision; reference agrees to ~1e-6 rel at these magnitudes)
    h = jnp.dot(w1t_ref[...], xt_ref[...], preferred_element_type=jnp.float32)
    h = h + b1_ref[...]                                   # [H,1] lane-broadcast
    # leaky_relu, negative_slope = 0.01 (VPU, f32 — safe on v5e too).
    h = jnp.where(h > 0, h, jnp.float32(0.01) * h)
    # fc2: Q^T = sum over the 64 hidden rows (sublane reduce, no MXU, no XLU transpose).
    q = jnp.sum(h * w2_ref[...], axis=0, keepdims=True) + b2_ref[0]   # [1, tile_b]
    q_ref[...] = q.astype(q_ref.dtype)


@functools.partial(jax.jit, static_argnames=("tile_b",))
def critic_forward(state, action1, action2, params, *, tile_b=8192):
    """Pallas-backed Critic forward pass.

    state:   [B, S]   action1: [B, A1]   action2: [B, A2]
    params:  w1 [D, 64] (D = S + A1 + A2), b1 [64], w2 [64, 1], b2 [1]
    returns: Q [B, 1]
    """
    B = state.shape[0]

    # torch.cat([state, a1, a2], dim=1) — materialized once (as in the torch module),
    # native dtype kept (no forced f32 upcast).  Then batch goes on lanes: [D, B].
    x = jnp.concatenate([state, action1, action2], axis=1)   # [B, D]
    D = x.shape[1]
    xt = x.T                                                  # [D, B]

    H = params["w1"].shape[1]
    w1t = jnp.asarray(params["w1"]).T                         # [H, D]
    b1c = jnp.asarray(params["b1"]).reshape(H, 1)             # [H, 1]
    w2c = jnp.asarray(params["w2"]).reshape(H, 1)             # [H, 1]
    b2 = jnp.asarray(params["b2"]).reshape(1).astype(jnp.float32)   # SMEM scalar

    # Batch tiling along lanes: keep the pipelined grid by padding B instead of
    # collapsing to one giant block.
    tile_b = max(128, (tile_b // 128) * 128)
    if B > tile_b:
        tile = tile_b
        b_pad = _round_up(B, tile)
    else:
        b_pad = _round_up(B, 128)   # single lane-aligned block for small B
        tile = b_pad
    if b_pad != B:
        xt = jnp.pad(xt, ((0, 0), (0, b_pad - B)))
    grid = (b_pad // tile,)

    out_dtype = jnp.promote_types(x.dtype, w1t.dtype)

    # v7x: only CORE_PARALLEL actually shards the grid across the 2 TensorCores.
    dev = jax.devices()[0]
    if dev.platform == "tpu" and "v7" in dev.device_kind.lower():
        dim_sem = (pltpu.CORE_PARALLEL,)
    else:
        dim_sem = ("parallel",)

    const = lambda i: (0, 0)   # weights / biases stay resident across batch tiles

    q_row = pl.pallas_call(
        _critic_kernel,
        out_shape=jax.ShapeDtypeStruct((1, b_pad), out_dtype),
        grid_spec=pl.GridSpec(
            grid=grid,
            in_specs=[
                # If profiling shows exposed DMA, add pipeline_mode=pl.Buffered(3) here.
                pl.BlockSpec((D, tile), lambda i: (0, i)),          # x^T batch tile
                pl.BlockSpec((H, D), const),                        # W1^T
                pl.BlockSpec((H, 1), const),                        # b1 column
                pl.BlockSpec((H, 1), const),                        # w2 column
                pl.BlockSpec(memory_space=pltpu.MemorySpace.SMEM),  # b2 scalar
            ],
            out_specs=pl.BlockSpec((1, tile), lambda i: (0, i)),    # lane-dense [1, B]
        ),
        compiler_params=pltpu.CompilerParams(
            dimension_semantics=dim_sem,
            vmem_limit_bytes=32 * 1024 * 1024,   # ample for tile_b=8192 (~6 MiB working set)
        ),
    )(xt, w1t, b1c, w2c, b2)

    # (1, B_pad) -> drop padding -> (B, 1); row-major reshape is free.
    return q_row[:, :B].reshape(B, 1)


def init_critic_params(key, input_states, action_dim, n_agent, hidden=64):
    """Deterministic synthetic parameter init (nn.Linear-style, stored [in, out])."""
    d_in = (input_states + action_dim) * n_agent
    k1, k2, k3, k4 = jax.random.split(key, 4)
    bound1 = 1.0 / jnp.sqrt(d_in)
    bound2 = 1.0 / jnp.sqrt(hidden)
    w1 = jax.random.uniform(k1, (d_in, hidden), jnp.float32, -bound1, bound1)
    b1 = jax.random.uniform(k2, (hidden,), jnp.float32, -bound1, bound1)
    w2 = jax.random.uniform(k3, (hidden, 1), jnp.float32, -bound2, bound2)
    b2 = jax.random.uniform(k4, (1,), jnp.float32, -bound2, bound2)
    return {"w1": w1, "b1": b1, "w2": w2, "b2": b2}


def critic_reference(state, action1, action2, params):
    """Pure-JAX reference, faithful to the torch module."""
    x = jnp.concatenate([state, action1, action2], axis=1)
    h = x @ params["w1"] + params["b1"].reshape(1, -1)
    h = jnp.where(h > 0, h, 0.01 * h)
    return h @ params["w2"].reshape(-1, 1) + params["b2"].reshape(1, 1)


if __name__ == "__main__":
    # Small, consistent shapes: n_agent=2, input_states=8, action_dim=8
    #   -> fc1 input dim D = (8 + 8) * 2 = 32
    input_states, action_dim, n_agent = 8, 8, 2
    B = 8
    key = jax.random.PRNGKey(0)
    kp, ks, ka1, ka2 = jax.random.split(key, 4)

    params = init_critic_params(kp, input_states, action_dim, n_agent)

    # Joint state [B, input_states * n_agent], each action head [B, action_dim].
    state = jax.random.normal(ks, (B, input_states * n_agent), jnp.float32)
    action1 = jax.random.normal(ka1, (B, action_dim), jnp.float32)
    action2 = jax.random.normal(ka2, (B, action_dim), jnp.float32)

    q = jax.block_until_ready(critic_forward(state, action1, action2, params))

    q_ref = critic_reference(state, action1, action2, params)
    assert q.shape == (B, 1)
    assert jnp.allclose(q, q_ref, atol=1e-4, rtol=1e-4), "mismatch vs reference"

    print("KERNEL_OK")
</pallas_src>

<mosaic_0001>
module attributes {stable_mosaic.version = 11 : i64} {
  func.func @_critic_kernel(%arg0: i32, %arg1: memref<32x128xf32, #tpu.memory_space<vmem>>, %arg2: memref<64x32xf32, #tpu.memory_space<vmem>>, %arg3: memref<64x1xf32, #tpu.memory_space<vmem>>, %arg4: memref<64x1xf32, #tpu.memory_space<vmem>>, %arg5: memref<1xf32, #tpu.memory_space<smem>>, %arg6: memref<1x128xf32, #tpu.memory_space<vmem>>) attributes {dimension_semantics = [#tpu.dimension_semantics<parallel>], iteration_bounds = array<i64: 1>, scalar_prefetch = 0 : i64, scratch_operands = 0 : i64, tpu.core_type = #tpu.core_type<tc>, window_params = [{transform_indices = @transform_0, window_bounds = array<i64: 32, 128>}, {pipeline_mode = #tpu.pipeline_mode<synchronous>, transform_indices = @transform_1, window_bounds = array<i64: 64, 32>}, {pipeline_mode = #tpu.pipeline_mode<synchronous>, transform_indices = @transform_2, window_bounds = array<i64: 64, 1>}, {pipeline_mode = #tpu.pipeline_mode<synchronous>, transform_indices = @transform_3, window_bounds = array<i64: 64, 1>}, {transform_indices = @transform_4, window_bounds = array<i64: 1>}, {transform_indices = @transform_5, window_bounds = array<i64: 1, 128>}]} {
    %c0 = arith.constant 0 : index
    %c0_0 = arith.constant 0 : index
    %0 = vector.load %arg2[%c0, %c0_0] : memref<64x32xf32, #tpu.memory_space<vmem>>, vector<64x32xf32>
    %c0_1 = arith.constant 0 : index
    %c0_2 = arith.constant 0 : index
    %1 = vector.load %arg1[%c0_1, %c0_2] : memref<32x128xf32, #tpu.memory_space<vmem>>, vector<32x128xf32>
    %cst = arith.constant dense<0.000000e+00> : vector<64x128xf32>
    %2 = tpu.matmul %0, %1, %cst {dimension_numbers = #tpu.dot_dimension_numbers<[1], [0], [0], [1], [0, 0, 1, 1], [], []>} : vector<64x32xf32>, vector<32x128xf32>, vector<64x128xf32> -> vector<64x128xf32>
    %c0_3 = arith.constant 0 : index
    %c0_4 = arith.constant 0 : index
    %3 = vector.load %arg3[%c0_3, %c0_4] : memref<64x1xf32, #tpu.memory_space<vmem>>, vector<64x1xf32>
    %4 = vector.broadcast %3 : vector<64x1xf32> to vector<64x128xf32>
    %5 = arith.addf %2, %4 : vector<64x128xf32>
    %cst_5 = arith.constant 0.000000e+00 : f32
    %6 = vector.broadcast %cst_5 : f32 to vector<64x128xf32>
    %7 = arith.cmpf ogt, %5, %6 : vector<64x128xf32>
    %cst_6 = arith.constant 0.00999999977 : f32
    %8 = vector.broadcast %cst_6 : f32 to vector<64x128xf32>
    %9 = arith.mulf %8, %5 : vector<64x128xf32>
    %10 = arith.select %7, %5, %9 : vector<64x128xi1>, vector<64x128xf32>
    %c0_7 = arith.constant 0 : index
    %c0_8 = arith.constant 0 : index
    %11 = vector.load %arg4[%c0_7, %c0_8] : memref<64x1xf32, #tpu.memory_space<vmem>>, vector<64x1xf32>
    %12 = vector.broadcast %11 : vector<64x1xf32> to vector<64x128xf32>
    %13 = arith.mulf %10, %12 : vector<64x128xf32>
    %cst_9 = arith.constant dense<0.000000e+00> : vector<128xf32>
    %14 = vector.multi_reduction <add>, %13, %cst_9 [0] : vector<64x128xf32> to vector<128xf32>
    %15 = vector.shape_cast %14 : vector<128xf32> to vector<1x128xf32>
    %c0_10 = arith.constant 0 : index
    %16 = memref.load %arg5[%c0_10] : memref<1xf32, #tpu.memory_space<smem>>
    %17 = vector.broadcast %16 : f32 to vector<1x128xf32>
    %18 = arith.addf %15, %17 : vector<1x128xf32>
    %c0_11 = arith.constant 0 : index
    %c0_12 = arith.constant 0 : index
    %19 = vector.load %arg6[%c0_11, %c0_12] : memref<1x128xf32, #tpu.memory_space<vmem>>, vector<1x128xf32>
    tpu.vector_store %arg6[%c0_11, %c0_12], %18 {strides = array<i32>} : memref<1x128xf32, #tpu.memory_space<vmem>>, vector<1x128xf32>,
    return
  }
  func.func @transform_0(%arg0: i32) -> (i32, i32) {
    %c0_i32 = arith.constant 0 : i32
    %c0_i32_0 = arith.constant 0 : i32
    return %c0_i32, %arg0 : i32, i32
  }
  func.func @transform_1(%arg0: i32) -> (i32, i32) {
    %c0_i32 = arith.constant 0 : i32
    %c0_i32_0 = arith.constant 0 : i32
    %c0_i32_1 = arith.constant 0 : i32
    return %c0_i32, %c0_i32_0 : i32, i32
  }
  func.func @transform_2(%arg0: i32) -> (i32, i32) {
    %c0_i32 = arith.constant 0 : i32
    %c0_i32_0 = arith.constant 0 : i32
    %c0_i32_1 = arith.constant 0 : i32
    return %c0_i32, %c0_i32_0 : i32, i32
  }
  func.func @transform_3(%arg0: i32) -> (i32, i32) {
    %c0_i32 = arith.constant 0 : i32
    %c0_i32_0 = arith.constant 0 : i32
    %c0_i32_1 = arith.constant 0 : i32
    return %c0_i32, %c0_i32_0 : i32, i32
  }
  func.func @transform_4(%arg0: i32) -> i32 {
    %c0_i32 = arith.constant 0 : i32
    %c0_i32_0 = arith.constant 0 : i32
    return %c0_i32 : i32
  }
  func.func @transform_5(%arg0: i32) -> (i32, i32) {
    %c0_i32 = arith.constant 0 : i32
    %c0_i32_0 = arith.constant 0 : i32
    return %c0_i32, %arg0 : i32, i32
  }
}

</mosaic_0001>

<llo_original>
// kernel: critic_forward.1
$region0: #{critic_forward.1}
  #allocation0 [shape = 'u32[]', space=smem, size = 0x4, offset = 0x4, fixed_abs, tag = 'smem constant byte address 0x4 - core index']
  #allocation1 [shape = 'u32[72,128]{1,0:T(1,128)}', space=vmem, size = 0x9000, scoped, tag = 'internal scratch']
  #allocation2 [shape = 'f32[1]{0:T(128)S(6)}', space=smem, size = 0x200, scoped, tag = 'scoped memory for critic_forward.1']
  %s0 = inlined_call_operand.vmem [shape: f32[32,128], index: 0, kind: input, shape index: {}]
  %s1 = inlined_call_operand.vmem [shape: f32[64,32], index: 1, kind: input, shape index: {}]
  %s2 = inlined_call_operand.vmem [shape: f32[64,1], index: 2, kind: input, shape index: {}]
  %s3 = inlined_call_operand.vmem [shape: f32[64,1], index: 3, kind: input, shape index: {}]
  %s4 = inlined_call_operand.<no memory space> [shape: f32[1], index: 4, kind: input, shape index: {}]
  %s5 = inlined_call_operand.vmem [shape: f32[1,128], index: 5, kind: output, shape index: {}]
  %s6 = sld [smem:[#allocation0]]
  $region30: #{critic_forward.1} parent=0
    _
  %s8 = ssub.s32 1, %s6
  %s9 = scalar_select 0, %s8, %s6
  %10 = sst [smem:[#allocation2]] %s4
  // Predicated region
  $region2: #{critic_forward.1} parent=0 // pred_check
    _
  $region3: #{critic_forward.1} parent=0 // pred_check_branch
    %12 = sbr.rel (0) target = $region5
  $region4: #{critic_forward.1} parent=0 // pred_region
    _
  $region5: #{critic_forward.1} parent=0 // pred_fallthru
    _
  // Predicated region
  $region6: #{critic_forward.1} parent=0 // pred_check
    _
  $region7: #{critic_forward.1} parent=0 // pred_check_branch
    %14 = sbr.rel (0) target = $region9
  $region8: #{critic_forward.1} parent=0 // pred_region
    _
  $region9: #{critic_forward.1} parent=0 // pred_fallthru
    _
  // Predicated region
  $region10: #{critic_forward.1} parent=0 // pred_check
    _
  $region11: #{critic_forward.1} parent=0 // pred_check_branch
    %16 = sbr.rel (0) target = $region13
  $region12: #{critic_forward.1} parent=0 // pred_region
    _
  $region13: #{critic_forward.1} parent=0 // pred_fallthru
    _
  // Predicated region
  $region14: #{critic_forward.1} parent=0 // pred_check
    _
  $region15: #{critic_forward.1} parent=0 // pred_check_branch
    %18 = sbr.rel (0) target = $region17
  $region16: #{critic_forward.1} parent=0 // pred_region
    _
  $region17: #{critic_forward.1} parent=0 // pred_fallthru
    _
  // Predicated region
  $region18: #{critic_forward.1} parent=0 // pred_check
    _
  $region19: #{critic_forward.1} parent=0 // pred_check_branch
    %20 = sbr.rel (0) target = $region21
  $region20: #{critic_forward.1} parent=0 // pred_region
    _
  $region21: #{critic_forward.1} parent=0 // pred_fallthru
    _
  %v21 = vld [vmem:[%s1] sm:$0xff]
  %v22 = vld [vmem:[%s1 + $0x8] sm:$0xff]
  %v23 = vld [vmem:[%s1 + $0x10] sm:$0xff]
  %v24 = vld [vmem:[%s1 + $0x18] sm:$0xff]
  %v25 = vld [vmem:[%s1 + $0x20] sm:$0xff]
  %v26 = vld [vmem:[%s1 + $0x28] sm:$0xff]
  %v27 = vld [vmem:[%s1 + $0x30] sm:$0xff]
  %v28 = vld [vmem:[%s1 + $0x38] sm:$0xff]
  %v29 = vld [vmem:[%s0] sm:$0xff]
  %v30 = vld [vmem:[%s0 + $0x8] sm:$0xff]
  %v31 = vld [vmem:[%s0 + $0x10] sm:$0xff]
  %v32 = vld [vmem:[%s0 + $0x18] sm:$0xff]
  %v33 = vld [vmem:[%s2] sm:$0xff]
  %v34 = vld [vmem:[%s2 + $0x8] sm:$0xff]
  %v35 = vld [vmem:[%s2 + $0x10] sm:$0xff]
  %v36 = vld [vmem:[%s2 + $0x18] sm:$0xff]
  %v37 = vld [vmem:[%s2 + $0x20] sm:$0xff]
  %v38 = vld [vmem:[%s2 + $0x28] sm:$0xff]
  %v39 = vld [vmem:[%s2 + $0x30] sm:$0xff]
  %v40 = vld [vmem:[%s2 + $0x38] sm:$0xff]
  %42 = vset.pattern.permute.xlu0 0
  %43 = vperm.xlu0 %42, %v33
  %v44 = vpop.permute.xlu0 %43
  %47 = vset.pattern.permute.xlu0 0
  %48 = vperm.xlu0 %47, %v34
  %v49 = vpop.permute.xlu0 %48
  %52 = vset.pattern.permute.xlu0 0
  %53 = vperm.xlu0 %52, %v35
  %v54 = vpop.permute.xlu0 %53
  %57 = vset.pattern.permute.xlu0 0
  %58 = vperm.xlu0 %57, %v36
  %v59 = vpop.permute.xlu0 %58
  %62 = vset.pattern.permute.xlu0 0
  %63 = vperm.xlu0 %62, %v37
  %v64 = vpop.permute.xlu0 %63
  %67 = vset.pattern.permute.xlu0 0
  %68 = vperm.xlu0 %67, %v38
  %v69 = vpop.permute.xlu0 %68
  %72 = vset.pattern.permute.xlu0 0
  %73 = vperm.xlu0 %72, %v39
  %v74 = vpop.permute.xlu0 %73
  %77 = vset.pattern.permute.xlu0 0
  %78 = vperm.xlu0 %77, %v40
  %v79 = vpop.permute.xlu0 %78
  %vm81 = vcmask 261120
  %v83 = vsel %vm81, %v21, 0
  %v86 = vsel %vm81, %v22, 0
  %v89 = vsel %vm81, %v23, 0
  %v92 = vsel %vm81, %v24, 0
  %v95 = vsel %vm81, %v25, 0
  %v98 = vsel %vm81, %v26, 0
  %v101 = vsel %vm81, %v27, 0
  %v104 = vsel %vm81, %v28, 0
  %106 = vmatpush.msra.mxu0 0.0
  %107 = vmatpush.msra.mxu0 0.0
  %108 = vmatpush.msra.mxu0 0.0
  %109 = vmatpush.msra.mxu0 0.0
  %110 = vmatpush.msra.mxu0 0.0
  %111 = vmatpush.msra.mxu0 0.0
  %112 = vmatpush.msra.mxu0 0.0
  %113 = vmatpush.msra.mxu0 0.0
  %114 = vmatpush.msra.mxu0 0.0
  %115 = vmatpush.msra.mxu0 0.0
  %116 = vmatpush.msra.mxu0 0.0
  %117 = vmatpush.msra.mxu0 0.0
  %118 = vmatpush.msra.mxu0 %v32
  %119 = vmatpush.msra.mxu0 %v31
  %120 = vmatpush.msra.mxu0 %v30
  %121 = vmatpush.msra.mxu0 %v29
  %122 = vmatmul.f32.gmra.mxu0 %v83
  %v123 = vpop.f32.mrf.mxu0
  %v124 = vadd.f32 %v44, %v123
  %125 = vmatmul.f32.gmra.mxu0 %v86
  %v126 = vpop.f32.mrf.mxu0
  %v127 = vadd.f32 %v49, %v126
  %128 = vmatmul.f32.gmra.mxu0 %v89
  %v129 = vpop.f32.mrf.mxu0
  %v130 = vadd.f32 %v54, %v129
  %131 = vmatmul.f32.gmra.mxu0 %v92
  %v132 = vpop.f32.mrf.mxu0
  %v133 = vadd.f32 %v59, %v132
  %134 = vmatmul.f32.gmra.mxu0 %v95
  %v135 = vpop.f32.mrf.mxu0
  %v136 = vadd.f32 %v64, %v135
  %137 = vmatmul.f32.gmra.mxu0 %v98
  %v138 = vpop.f32.mrf.mxu0
  %v139 = vadd.f32 %v69, %v138
  %140 = vmatmul.f32.gmra.mxu0 %v101
  %v141 = vpop.f32.mrf.mxu0
  %v142 = vadd.f32 %v74, %v141
  %143 = vmatmul.f32.gmra.mxu0 %v104
  %v144 = vpop.f32.mrf.mxu0
  %v145 = vadd.f32 %v79, %v144
  %146 = vdwg.mxu0
  %vm147 = vcmp.gt.f32.partialorder %v124, 0.0
  %vm148 = vcmp.gt.f32.partialorder %v127, 0.0
  %vm149 = vcmp.gt.f32.partialorder %v130, 0.0
  %vm150 = vcmp.gt.f32.partialorder %v133, 0.0
  %vm151 = vcmp.gt.f32.partialorder %v136, 0.0
  %vm152 = vcmp.gt.f32.partialorder %v139, 0.0
  %vm153 = vcmp.gt.f32.partialorder %v142, 0.0
  %vm154 = vcmp.gt.f32.partialorder %v145, 0.0
  %v155 = vmul.f32 %v124, 0.01
  %v156 = vmul.f32 %v127, 0.01
  %v157 = vmul.f32 %v130, 0.01
  %v158 = vmul.f32 %v133, 0.01
  %v159 = vmul.f32 %v136, 0.01
  %v160 = vmul.f32 %v139, 0.01
  %v161 = vmul.f32 %v142, 0.01
  %v162 = vmul.f32 %v145, 0.01
  %v163 = vsel %vm147, %v124, %v155
  %v164 = vsel %vm148, %v127, %v156
  %v165 = vsel %vm149, %v130, %v157
  %v166 = vsel %vm150, %v133, %v158
  %v167 = vsel %vm151, %v136, %v159
  %v168 = vsel %vm152, %v139, %v160
  %v169 = vsel %vm153, %v142, %v161
  %v170 = vsel %vm154, %v145, %v162
  %v171 = vld [vmem:[%s3] sm:$0xff]
  %v172 = vld [vmem:[%s3 + $0x8] sm:$0xff]
  %v173 = vld [vmem:[%s3 + $0x10] sm:$0xff]
  %v174 = vld [vmem:[%s3 + $0x18] sm:$0xff]
  %v175 = vld [vmem:[%s3 + $0x20] sm:$0xff]
  %v176 = vld [vmem:[%s3 + $0x28] sm:$0xff]
  %v177 = vld [vmem:[%s3 + $0x30] sm:$0xff]
  %v178 = vld [vmem:[%s3 + $0x38] sm:$0xff]
  %180 = vset.pattern.permute.xlu0 0
  %181 = vperm.xlu0 %180, %v171
  %v182 = vpop.permute.xlu0 %181
  %185 = vset.pattern.permute.xlu0 0
  %186 = vperm.xlu0 %185, %v172
  %v187 = vpop.permute.xlu0 %186
  %190 = vset.pattern.permute.xlu0 0
  %191 = vperm.xlu0 %190, %v173
  %v192 = vpop.permute.xlu0 %191
  %195 = vset.pattern.permute.xlu0 0
  %196 = vperm.xlu0 %195, %v174
  %v197 = vpop.permute.xlu0 %196
  %200 = vset.pattern.permute.xlu0 0
  %201 = vperm.xlu0 %200, %v175
  %v202 = vpop.permute.xlu0 %201
  %205 = vset.pattern.permute.xlu0 0
  %206 = vperm.xlu0 %205, %v176
  %v207 = vpop.permute.xlu0 %206
  %210 = vset.pattern.permute.xlu0 0
  %211 = vperm.xlu0 %210, %v177
  %v212 = vpop.permute.xlu0 %211
  %215 = vset.pattern.permute.xlu0 0
  %216 = vperm.xlu0 %215, %v178
  %v217 = vpop.permute.xlu0 %216
  %v219 = vmul.f32 %v163, %v182
  %v220 = vmul.f32 %v164, %v187
  %v221 = vmul.f32 %v165, %v192
  %v222 = vmul.f32 %v166, %v197
  %v223 = vmul.f32 %v167, %v202
  %v224 = vmul.f32 %v168, %v207
  %v225 = vmul.f32 %v169, %v212
  %v226 = vmul.f32 %v170, %v217
  %v227 = vadd.f32 %v219, %v220
  %v228 = vadd.f32 %v227, %v221
  %v229 = vadd.f32 %v228, %v222
  %v230 = vadd.f32 %v229, %v223
  %v231 = vadd.f32 %v230, %v224
  %v232 = vadd.f32 %v231, %v225
  %v233 = vadd.f32 %v232, %v226
  %v234 = vrot.slane %v233, 4
  %v235 = vadd.f32 %v233, %v234
  %v236 = vrot.slane %v235, 2
  %v237 = vadd.f32 %v235, %v236
  %v238 = vrot.slane %v237, 1
  %v239 = vadd.f32 %v237, %v238
  %s240 = sld [smem:[#allocation2]]
  %v241 = vstv %s240
  %v242 = vadd.f32 %v239, %v241
  %243 = vst [vmem:[%s5] sm:$0x1] %v242
  // Predicated region
  $region22: #{critic_forward.1} parent=0 // pred_check
    _
  $region23: #{critic_forward.1} parent=0 // pred_check_branch
    %245 = sbr.rel (0) target = $region25
  $region24: #{critic_forward.1} parent=0 // pred_region
    _
  $region25: #{critic_forward.1} parent=0 // pred_fallthru
    _
  // Predicated region
  $region26: #{critic_forward.1} parent=0 // pred_check
    _
  $region27: #{critic_forward.1} parent=0 // pred_check_branch
    %247 = sbr.rel (0) target = $region29
  $region28: #{critic_forward.1} parent=0 // pred_region
    _
  $region29: #{critic_forward.1} parent=0 // pred_fallthru
    _

</llo_original>
